<compile_context>
chip_gen: v7x
topology: tpu7x:2x2x1
jax: 0.10.0
libtpu: 0.0.40
codegen_flags: <defaults>
</compile_context>

<pallas_src>
import jax
import jax.numpy as jnp
from jax.experimental import pallas as pl
from jax.experimental.pallas import tpu as pltpu


def _ce_kernel(pred_ref, gt_ref, out_ref):
    # pred_ref: (1, C, TS, 128)   gt_ref: (1, 1, TS, 128)   out_ref: (1, 1, 8, 128)
    C = pred_ref.shape[1]
    gt = gt_ref[0, 0].astype(jnp.int32)                      # (TS, 128), -1 = pad
    ts = gt.shape[0]

    def body(c, carry):
        esum, picked = carry
        x = pred_ref[0, c].astype(jnp.float32)               # (TS, 128) dense tile
        # single-EUP-push sigmoid
        s = 0.5 * jnp.tanh(0.5 * x) + 0.5
        esum = esum + jnp.exp(s)                              # softmax denominator
        picked = picked + jnp.where(gt == c, s, 0.0)          # gather target logit
        return esum, picked

    init = (jnp.zeros((ts, 128), jnp.float32),
            jnp.zeros((ts, 128), jnp.float32))
    esum, picked = jax.lax.fori_loop(0, C, body, init, unroll=True)

    # sigmoid output is in (0, 1): exp(s) <= e, so no max-subtraction is needed.
    loss = jnp.where(gt >= 0, jnp.log(esum) - picked, 0.0)    # (TS, 128)

    # Fold sublane groups into a dense (8, 128) partial -> unmasked store,
    # negligible HBM writeback per tile.
    out_ref[0, 0] = jnp.sum(loss.reshape(ts // 8, 8, 128), axis=0)


def _round_up(a, b):
    return ((a + b - 1) // b) * b


def cross_entropy_loss(pred_nchw, gt_nhw, target_tile_bytes=4 * 1024 * 1024):
    """Mean cross-entropy of softmax(sigmoid(pred)) vs integer targets gt.

    pred_nchw: (N, C, H, W) float; gt_nhw: (N, H, W) integer class indices.
    Matches torch: Sigmoid() -> nn.CrossEntropyLoss(weight=None, reduction='mean').
    """
    N, C, H, W = pred_nchw.shape
    L = H * W
    R = N * L

    # int8 targets when the class count fits (cuts gt HBM bytes 4x); -1 = pad.
    use_i8 = C <= 127
    gt_dtype = jnp.int8 if use_i8 else jnp.int32
    row_align = 32 if use_i8 else 8            # int8 packed sublane tile is (32, 128)

    itemsize = jnp.dtype(pred_nchw.dtype).itemsize
    n_rows = -(-L // 128)                      # spatial rows of 128 lanes
    bytes_per_row = C * 128 * itemsize
    ts_target = _round_up(max(row_align, target_tile_bytes // bytes_per_row),
                          row_align)
    n_rows_min = _round_up(max(n_rows, row_align), row_align)
    n_tiles = -(-n_rows_min // ts_target)
    ts = _round_up(-(-n_rows_min // n_tiles), row_align)
    n_rows_pad = ts * n_tiles
    L_pad = n_rows_pad * 128

    pred = pred_nchw.reshape(N, C, L)
    gt = gt_nhw.astype(gt_dtype).reshape(N, 1, L)
    pad = L_pad - L
    if pad:
        pred = jnp.pad(pred, ((0, 0), (0, 0), (0, pad)))
        gt = jnp.pad(gt, ((0, 0), (0, 0), (0, pad)), constant_values=-1)

    # Dense 4-D layout: spatial -> (rows, 128) so every vreg is fully used
    # regardless of C; classes are a leading axis reduced with dense VPU adds.
    pred = pred.reshape(N, C, n_rows_pad, 128)
    gt = gt.reshape(N, 1, n_rows_pad, 128)

    partials = pl.pallas_call(
        _ce_kernel,
        out_shape=jax.ShapeDtypeStruct((N, n_tiles, 8, 128), jnp.float32),
        grid_spec=pltpu.PrefetchScalarGridSpec(
            num_scalar_prefetch=0,
            grid=(N, n_tiles),
            in_specs=[
                pl.BlockSpec((1, C, ts, 128), lambda n, j: (n, 0, j, 0)),
                pl.BlockSpec((1, 1, ts, 128), lambda n, j: (n, 0, j, 0)),
            ],
            out_specs=pl.BlockSpec((1, 1, 8, 128), lambda n, j: (n, j, 0, 0)),
        ),
        compiler_params=pltpu.CompilerParams(
            dimension_semantics=("parallel", "parallel"),
            vmem_limit_bytes=64 * 1024 * 1024,
        ),
    )(pred, gt)

    # TODO(synk): torch's ignore_index=-100 would also exclude ignored rows from
    # the mean denominator; here all real targets are assumed valid, so the mean
    # divides by N*H*W (identical to the reference module for valid targets).
    return (jnp.sum(partials) / R).astype(jnp.float32)


def _reference(pred, gt):
    N, C, H, W = pred.shape
    s = jax.nn.sigmoid(jnp.transpose(pred, (0, 2, 3, 1)).reshape(-1, C))
    return jnp.mean(
        jax.nn.logsumexp(s, axis=-1)
        - jnp.take_along_axis(s, gt.reshape(-1, 1), axis=-1)[:, 0])


if __name__ == "__main__":
    key = jax.random.PRNGKey(0)
    k1, k2, k3, k4 = jax.random.split(key, 4)

    # Primary test: matches the module's nominal small shapes.
    N, C, H, W = 2, 4, 16, 16
    pred = jax.random.normal(k1, (N, C, H, W), dtype=jnp.float32)
    gt = jax.random.randint(k2, (N, H, W), 0, C, dtype=jnp.int32)

    loss = cross_entropy_loss(pred, gt)
    jax.block_until_ready(loss)
    ref = _reference(pred, gt)
    assert jnp.allclose(loss, ref, atol=1e-5, rtol=1e-5), (loss, ref)

    # Secondary test: odd spatial size / odd class count exercises lane padding.
    N2, C2, H2, W2 = 1, 3, 7, 9
    pred2 = jax.random.normal(k3, (N2, C2, H2, W2), dtype=jnp.float32)
    gt2 = jax.random.randint(k4, (N2, H2, W2), 0, C2, dtype=jnp.int32)

    loss2 = cross_entropy_loss(pred2, gt2)
    jax.block_until_ready(loss2)
    ref2 = _reference(pred2, gt2)
    assert jnp.allclose(loss2, ref2, atol=1e-5, rtol=1e-5), (loss2, ref2)

    print("KERNEL_OK")
</pallas_src>

<mosaic_0001>
module attributes {stable_mosaic.version = 11 : i64} {
  func.func @_ce_kernel(%arg0: i32, %arg1: i32, %arg2: memref<1x4x32x128xf32, #tpu.memory_space<vmem>>, %arg3: memref<1x1x32x128xi8, #tpu.memory_space<vmem>>, %arg4: memref<1x1x8x128xf32, #tpu.memory_space<vmem>>) attributes {dimension_semantics = [#tpu.dimension_semantics<parallel>, #tpu.dimension_semantics<parallel>], iteration_bounds = array<i64: 2, 1>, scalar_prefetch = 0 : i64, scratch_operands = 0 : i64, tpu.core_type = #tpu.core_type<tc>, window_params = [{transform_indices = @transform_0, window_bounds = array<i64: 1, 4, 32, 128>}, {transform_indices = @transform_1, window_bounds = array<i64: 1, 1, 32, 128>}, {transform_indices = @transform_2, window_bounds = array<i64: 1, 1, 8, 128>}]} {
    %c0 = arith.constant 0 : index
    %c0_0 = arith.constant 0 : index
    %c0_1 = arith.constant 0 : index
    %c0_2 = arith.constant 0 : index
    %0 = vector.load %arg3[%c0, %c0_0, %c0_1, %c0_2] : memref<1x1x32x128xi8, #tpu.memory_space<vmem>>, vector<1x1x32x128xi8>
    %1 = vector.shape_cast %0 : vector<1x1x32x128xi8> to vector<32x128xi8>
    %2 = arith.extsi %1 : vector<32x128xi8> to vector<32x128xi32>
    %cst = arith.constant 0.000000e+00 : f32
    %3 = vector.broadcast %cst : f32 to vector<32x128xf32>
    %cst_3 = arith.constant 0.000000e+00 : f32
    %4 = vector.broadcast %cst_3 : f32 to vector<32x128xf32>
    %c0_i32 = arith.constant 0 : i32
    %c0_4 = arith.constant 0 : index
    %5 = arith.index_cast %c0_i32 : i32 to index
    %c0_5 = arith.constant 0 : index
    %c0_6 = arith.constant 0 : index
    %6 = vector.load %arg2[%c0_4, %5, %c0_5, %c0_6] : memref<1x4x32x128xf32, #tpu.memory_space<vmem>>, vector<1x1x32x128xf32>
    %7 = vector.shape_cast %6 : vector<1x1x32x128xf32> to vector<32x128xf32>
    %cst_7 = arith.constant 5.000000e-01 : f32
    %8 = vector.broadcast %cst_7 : f32 to vector<32x128xf32>
    %9 = arith.mulf %8, %7 : vector<32x128xf32>
    %10 = math.tanh %9 : vector<32x128xf32>
    %cst_8 = arith.constant 5.000000e-01 : f32
    %11 = vector.broadcast %cst_8 : f32 to vector<32x128xf32>
    %12 = arith.mulf %11, %10 : vector<32x128xf32>
    %cst_9 = arith.constant 5.000000e-01 : f32
    %13 = vector.broadcast %cst_9 : f32 to vector<32x128xf32>
    %14 = arith.addf %12, %13 : vector<32x128xf32>
    %15 = math.exp %14 : vector<32x128xf32>
    %16 = arith.addf %3, %15 : vector<32x128xf32>
    %17 = vector.broadcast %c0_i32 : i32 to vector<32x128xi32>
    %18 = arith.cmpi eq, %2, %17 : vector<32x128xi32>
    %cst_10 = arith.constant 0.000000e+00 : f32
    %19 = vector.broadcast %cst_10 : f32 to vector<32x128xf32>
    %20 = arith.select %18, %14, %19 : vector<32x128xi1>, vector<32x128xf32>
    %21 = arith.addf %4, %20 : vector<32x128xf32>
    %c1_i32 = arith.constant 1 : i32
    %c0_11 = arith.constant 0 : index
    %22 = arith.index_cast %c1_i32 : i32 to index
    %c0_12 = arith.constant 0 : index
    %c0_13 = arith.constant 0 : index
    %23 = vector.load %arg2[%c0_11, %22, %c0_12, %c0_13] : memref<1x4x32x128xf32, #tpu.memory_space<vmem>>, vector<1x1x32x128xf32>
    %24 = vector.shape_cast %23 : vector<1x1x32x128xf32> to vector<32x128xf32>
    %cst_14 = arith.constant 5.000000e-01 : f32
    %25 = vector.broadcast %cst_14 : f32 to vector<32x128xf32>
    %26 = arith.mulf %25, %24 : vector<32x128xf32>
    %27 = math.tanh %26 : vector<32x128xf32>
    %cst_15 = arith.constant 5.000000e-01 : f32
    %28 = vector.broadcast %cst_15 : f32 to vector<32x128xf32>
    %29 = arith.mulf %28, %27 : vector<32x128xf32>
    %cst_16 = arith.constant 5.000000e-01 : f32
    %30 = vector.broadcast %cst_16 : f32 to vector<32x128xf32>
    %31 = arith.addf %29, %30 : vector<32x128xf32>
    %32 = math.exp %31 : vector<32x128xf32>
    %33 = arith.addf %16, %32 : vector<32x128xf32>
    %34 = vector.broadcast %c1_i32 : i32 to vector<32x128xi32>
    %35 = arith.cmpi eq, %2, %34 : vector<32x128xi32>
    %cst_17 = arith.constant 0.000000e+00 : f32
    %36 = vector.broadcast %cst_17 : f32 to vector<32x128xf32>
    %37 = arith.select %35, %31, %36 : vector<32x128xi1>, vector<32x128xf32>
    %38 = arith.addf %21, %37 : vector<32x128xf32>
    %c2_i32 = arith.constant 2 : i32
    %c0_18 = arith.constant 0 : index
    %39 = arith.index_cast %c2_i32 : i32 to index
    %c0_19 = arith.constant 0 : index
    %c0_20 = arith.constant 0 : index
    %40 = vector.load %arg2[%c0_18, %39, %c0_19, %c0_20] : memref<1x4x32x128xf32, #tpu.memory_space<vmem>>, vector<1x1x32x128xf32>
    %41 = vector.shape_cast %40 : vector<1x1x32x128xf32> to vector<32x128xf32>
    %cst_21 = arith.constant 5.000000e-01 : f32
    %42 = vector.broadcast %cst_21 : f32 to vector<32x128xf32>
    %43 = arith.mulf %42, %41 : vector<32x128xf32>
    %44 = math.tanh %43 : vector<32x128xf32>
    %cst_22 = arith.constant 5.000000e-01 : f32
    %45 = vector.broadcast %cst_22 : f32 to vector<32x128xf32>
    %46 = arith.mulf %45, %44 : vector<32x128xf32>
    %cst_23 = arith.constant 5.000000e-01 : f32
    %47 = vector.broadcast %cst_23 : f32 to vector<32x128xf32>
    %48 = arith.addf %46, %47 : vector<32x128xf32>
    %49 = math.exp %48 : vector<32x128xf32>
    %50 = arith.addf %33, %49 : vector<32x128xf32>
    %51 = vector.broadcast %c2_i32 : i32 to vector<32x128xi32>
    %52 = arith.cmpi eq, %2, %51 : vector<32x128xi32>
    %cst_24 = arith.constant 0.000000e+00 : f32
    %53 = vector.broadcast %cst_24 : f32 to vector<32x128xf32>
    %54 = arith.select %52, %48, %53 : vector<32x128xi1>, vector<32x128xf32>
    %55 = arith.addf %38, %54 : vector<32x128xf32>
    %c3_i32 = arith.constant 3 : i32
    %c0_25 = arith.constant 0 : index
    %56 = arith.index_cast %c3_i32 : i32 to index
    %c0_26 = arith.constant 0 : index
    %c0_27 = arith.constant 0 : index
    %57 = vector.load %arg2[%c0_25, %56, %c0_26, %c0_27] : memref<1x4x32x128xf32, #tpu.memory_space<vmem>>, vector<1x1x32x128xf32>
    %58 = vector.shape_cast %57 : vector<1x1x32x128xf32> to vector<32x128xf32>
    %cst_28 = arith.constant 5.000000e-01 : f32
    %59 = vector.broadcast %cst_28 : f32 to vector<32x128xf32>
    %60 = arith.mulf %59, %58 : vector<32x128xf32>
    %61 = math.tanh %60 : vector<32x128xf32>
    %cst_29 = arith.constant 5.000000e-01 : f32
    %62 = vector.broadcast %cst_29 : f32 to vector<32x128xf32>
    %63 = arith.mulf %62, %61 : vector<32x128xf32>
    %cst_30 = arith.constant 5.000000e-01 : f32
    %64 = vector.broadcast %cst_30 : f32 to vector<32x128xf32>
    %65 = arith.addf %63, %64 : vector<32x128xf32>
    %66 = math.exp %65 : vector<32x128xf32>
    %67 = arith.addf %50, %66 : vector<32x128xf32>
    %68 = vector.broadcast %c3_i32 : i32 to vector<32x128xi32>
    %69 = arith.cmpi eq, %2, %68 : vector<32x128xi32>
    %cst_31 = arith.constant 0.000000e+00 : f32
    %70 = vector.broadcast %cst_31 : f32 to vector<32x128xf32>
    %71 = arith.select %69, %65, %70 : vector<32x128xi1>, vector<32x128xf32>
    %72 = arith.addf %55, %71 : vector<32x128xf32>
    %c4_i32 = arith.constant 4 : i32
    %c0_i32_32 = arith.constant 0 : i32
    %73 = vector.broadcast %c0_i32_32 : i32 to vector<32x128xi32>
    %74 = arith.cmpi sge, %2, %73 : vector<32x128xi32>
    %75 = math.log %67 : vector<32x128xf32>
    %76 = arith.subf %75, %72 : vector<32x128xf32>
    %cst_33 = arith.constant 0.000000e+00 : f32
    %77 = vector.broadcast %cst_33 : f32 to vector<32x128xf32>
    %78 = arith.select %74, %76, %77 : vector<32x128xi1>, vector<32x128xf32>
    %79 = vector.shape_cast %78 : vector<32x128xf32> to vector<4x8x128xf32>
    %cst_34 = arith.constant dense<0.000000e+00> : vector<8x128xf32>
    %80 = vector.multi_reduction <add>, %79, %cst_34 [0] : vector<4x8x128xf32> to vector<8x128xf32>
    %c0_35 = arith.constant 0 : index
    %c0_36 = arith.constant 0 : index
    %c0_37 = arith.constant 0 : index
    %c0_38 = arith.constant 0 : index
    %81 = vector.load %arg4[%c0_35, %c0_36, %c0_37, %c0_38] : memref<1x1x8x128xf32, #tpu.memory_space<vmem>>, vector<1x1x8x128xf32>
    %82 = vector.shape_cast %81 : vector<1x1x8x128xf32> to vector<8x128xf32>
    %83 = vector.shape_cast %80 : vector<8x128xf32> to vector<1x1x8x128xf32>
    tpu.vector_store %arg4[%c0_35, %c0_36, %c0_37, %c0_38], %83 {strides = array<i32>} : memref<1x1x8x128xf32, #tpu.memory_space<vmem>>, vector<1x1x8x128xf32>,
    return
  }
  func.func @transform_0(%arg0: i32, %arg1: i32) -> (i32, i32, i32, i32) {
    %c0_i32 = arith.constant 0 : i32
    %c0_i32_0 = arith.constant 0 : i32
    %c0_i32_1 = arith.constant 0 : i32
    return %arg0, %c0_i32, %arg1, %c0_i32_0 : i32, i32, i32, i32
  }
  func.func @transform_1(%arg0: i32, %arg1: i32) -> (i32, i32, i32, i32) {
    %c0_i32 = arith.constant 0 : i32
    %c0_i32_0 = arith.constant 0 : i32
    %c0_i32_1 = arith.constant 0 : i32
    return %arg0, %c0_i32, %arg1, %c0_i32_0 : i32, i32, i32, i32
  }
  func.func @transform_2(%arg0: i32, %arg1: i32) -> (i32, i32, i32, i32) {
    %c0_i32 = arith.constant 0 : i32
    %c0_i32_0 = arith.constant 0 : i32
    %c0_i32_1 = arith.constant 0 : i32
    return %arg0, %arg1, %c0_i32, %c0_i32_0 : i32, i32, i32, i32
  }
}

</mosaic_0001>

<llo_original>
// kernel: tpu_custom_call.1
$region0: #{tpu_custom_call.1}
  #allocation0 [shape = 'u32[]', space=smem, size = 0x4, offset = 0x4, fixed_abs, tag = 'smem constant byte address 0x4 - core index']
  #allocation1 [shape = 'u32[144,128]{1,0:T(1,128)}', space=vmem, size = 0x12000, scoped, tag = 'internal scratch']
  %s0 = inlined_call_operand.hbm [shape: f32[2,4,32,128], index: 0, kind: input, shape index: {}]
  %s1 = inlined_call_operand.hbm [shape: s8[2,1,32,128], index: 1, kind: input, shape index: {}]
  %s2 = inlined_call_operand.hbm [shape: f32[2,1,8,128], index: 2, kind: output, shape index: {}]
  %s3 = sld [smem:[#allocation0]]
  $region49: #{tpu_custom_call.1} parent=0
    _
  %s5 = ssub.s32 1, %s3
  %s6 = scalar_select 0, %s5, %s3
  $region1: #{tpu_custom_call.1} parent=0
    #allocation2 [shape = 'u8[131072]{0}', space=vmem, size = 0x20000, scoped, tag = 'input window, operand 0']
    #allocation3 [shape = 's32[2]{0}', space=sflag, size = 0x8, scoped, tag = 'scoped memory for tpu_custom_call.1']
    #allocation4 [shape = 's32[2]{0}', space=sflag, size = 0x8, scoped, tag = 'scoped memory for tpu_custom_call.1']
    #allocation5 [shape = 'u8[8192]{0}', space=vmem, size = 0x2000, scoped, tag = 'input window, operand 1']
    #allocation6 [shape = 's32[2]{0}', space=sflag, size = 0x8, scoped, tag = 'scoped memory for tpu_custom_call.1']
    #allocation7 [shape = 'u8[8192]{0}', space=vmem, size = 0x2000, scoped, tag = 'output window, operand 0']
    %7 = vsyncpa [#allocation3], 0
    %s8 = scalar_lea.sflag [#allocation3], 1
    %9 = vsyncpa %s8, 0
    %10 = vsyncpa [#allocation6], 0
    %s11 = scalar_lea.sflag [#allocation6], 1
    %12 = vsyncpa %s11, 0
    %13 = vsyncpa [#allocation4], 0
    %s14 = scalar_lea.sflag [#allocation4], 1
    %15 = vsyncpa %s14, 0
    loop: start=0, step=1, limit=4
    $region2: #{tpu_custom_call.1} parent=1 // loop_pre_header
      _
    $region3: #{tpu_custom_call.1} parent=1 // loop_header
      %s17 = sphi 0, %s21
      %p18 = scmp.ge.s32.totalorder %s17, 4
      %s24 = sphi 0, %s36
      %s25 = sphi 0, %s32
      %s26 = sphi 0, %s24
      %s27 = sphi 0, %s25
      %s28 = sphi 0, %s26
      %s29 = sphi 0, %s27
      %s41 = sphi 0, %s43
      %s44 = sphi 0, %s41
      %s45 = sphi 0, %s44
      %s61 = sphi 0, %s45
      %s69 = sphi 0, %s71
      %s72 = sphi 0, %s69
      %s73 = sphi 0, %s72
      %s89 = sphi 0, %s73
      %s97 = sphi 0, %s99
      %s100 = sphi 0, %s97
      %s101 = sphi 0, %s100
      %s117 = sphi 0, %s101
    $region4: #{tpu_custom_call.1} parent=1 // loop_header_branch
      %20 = sbr.rel (%p18) target = $region8
    $region5: #{tpu_custom_call.1} parent=1 // loop_body
      %s22 = ssub.s32 %s17, 1
      %s23 = ssub.s32 %s17, 2
      %s30 = sadd.s32 1, %s25
      %p31 = scmp.ge.s32.totalorder %s30, 1
      %s32 = scalar_select %p31, 0, %s30
      %s33 = sadd.s32 1, %s24
      %s34 = scalar_select %p31, %s33, %s24
      %p35 = scmp.ge.s32.totalorder %s34, 2
      %s36 = scalar_select %p35, 0, %s34
      %s37 = ssub.s32 %s24, %s36
      %s38 = ssub.s32 %s25, %s32
      %s39 = sor.u32 %s37, %s38
      %p40 = scmp.eq.s32.totalorder %s39, 0
      %s42 = sadd.s32 %s41, 1
      %s43 = scalar_select %p40, %s41, %s42
      %p46 = pneg %p40
      %p47 = scmp.eq.s32.totalorder %s17, 1
      %p48 = por %p46, %p47
      %p49 = scmp.ne.s32.totalorder %s41, %s44
      %p50 = scmp.eq.s32.totalorder %s17, 0
      %p51 = por %p49, %p50
      %p52 = scmp.ne.s32.totalorder %s41, %s44
      %p53 = scmp.eq.s32.totalorder %s22, 1
      %p54 = por %p52, %p53
      %p55 = scmp.ne.s32.totalorder %s44, %s45
      %p56 = scmp.eq.s32.totalorder %s22, 0
      %p57 = por %p55, %p56
      %p58 = scmp.ne.s32.totalorder %s44, %s45
      %p59 = scmp.eq.s32.totalorder %s23, 1
      %p60 = por %p58, %p59
      %p62 = scmp.ne.s32.totalorder %s45, %s61
      %p63 = scmp.eq.s32.totalorder %s23, 0
      %p64 = por %p62, %p63
      %s65 = ssub.s32 %s24, %s36
      %s66 = ssub.s32 %s25, %s32
      %s67 = sor.u32 %s65, %s66
      %p68 = scmp.eq.s32.totalorder %s67, 0
      %s70 = sadd.s32 %s69, 1
      %s71 = scalar_select %p68, %s69, %s70
      %p74 = pneg %p68
      %p75 = scmp.eq.s32.totalorder %s17, 1
      %p76 = por %p74, %p75
      %p77 = scmp.ne.s32.totalorder %s69, %s72
      %p78 = scmp.eq.s32.totalorder %s17, 0
      %p79 = por %p77, %p78
      %p80 = scmp.ne.s32.totalorder %s69, %s72
      %p81 = scmp.eq.s32.totalorder %s22, 1
      %p82 = por %p80, %p81
      %p83 = scmp.ne.s32.totalorder %s72, %s73
      %p84 = scmp.eq.s32.totalorder %s22, 0
      %p85 = por %p83, %p84
      %p86 = scmp.ne.s32.totalorder %s72, %s73
      %p87 = scmp.eq.s32.totalorder %s23, 1
      %p88 = por %p86, %p87
      %p90 = scmp.ne.s32.totalorder %s73, %s89
      %p91 = scmp.eq.s32.totalorder %s23, 0
      %p92 = por %p90, %p91
      %s93 = ssub.s32 %s24, %s36
      %s94 = ssub.s32 %s25, %s32
      %s95 = sor.u32 %s93, %s94
      %p96 = scmp.eq.s32.totalorder %s95, 0
      %s98 = sadd.s32 %s97, 1
      %s99 = scalar_select %p96, %s97, %s98
      %p102 = pneg %p96
      %p103 = scmp.eq.s32.totalorder %s17, 1
      %p104 = por %p102, %p103
      %p105 = scmp.ne.s32.totalorder %s97, %s100
      %p106 = scmp.eq.s32.totalorder %s17, 0
      %p107 = por %p105, %p106
      %p108 = scmp.ne.s32.totalorder %s97, %s100
      %p109 = scmp.eq.s32.totalorder %s22, 1
      %p110 = por %p108, %p109
      %p111 = scmp.ne.s32.totalorder %s100, %s101
      %p112 = scmp.eq.s32.totalorder %s22, 0
      %p113 = por %p111, %p112
      %p114 = scmp.ne.s32.totalorder %s100, %s101
      %p115 = scmp.eq.s32.totalorder %s23, 1
      %p116 = por %p114, %p115
      %p118 = scmp.ne.s32.totalorder %s101, %s117
      %p119 = scmp.eq.s32.totalorder %s23, 0
      %p120 = por %p118, %p119
      %p121 = scmp.le.s32.totalorder 1, %s17
      %p122 = scmp.lt.s32.totalorder %s17, 3
      %p123 = pnand %p121, %p122
      %p124 = pneg %p123
      // Predicated region
      $region9: #{tpu_custom_call.1} parent=5 // pred_check
        _
      $region10: #{tpu_custom_call.1} parent=5 // pred_check_branch
        %126 = sbr.rel (%p123) target = $region12
      $region11: #{tpu_custom_call.1} parent=5 // pred_region
        %s127 = ssub.s32 %s17, 1
      $region12: #{tpu_custom_call.1} parent=5 // pred_fallthru
        _
      %p128 = scmp.lt.s32.totalorder %s17, 2
      // Predicated region
      $region13: #{tpu_custom_call.1} parent=5 // pred_check
        %p129 = pneg %p128
      $region14: #{tpu_custom_call.1} parent=5 // pred_check_branch
        %131 = sbr.rel (%p129) target = $region16
      $region15: #{tpu_custom_call.1} parent=5 // pred_region
        // Predicated region
        $region17: #{tpu_custom_call.1} parent=15 // pred_check
          %p132 = pneg %p51
        $region18: #{tpu_custom_call.1} parent=15 // pred_check_branch
          %134 = sbr.rel (%p132) target = $region20
        $region19: #{tpu_custom_call.1} parent=15 // pred_region
          %s135 = sand.u32 %s41, 1
          %s136 = scalar_lea.sflag [#allocation3], %s135
          %s137 = sand.u32 %s41, 1
          %s138 = smul.addr %s137, 128
          %s139 = scalar_lea.vmem [#allocation2], %s138
          %s140 = smul.u32 4, %s25
          %s142 = ssub.s32 2048, 2048
          %143 = vsyncadd %s136, %s142
          %s144 = smul.addr %s24, 16
          %s145 = sadd.s32 %s140, %s144
          %s146 = smul.addr %s145, 128
          %s147 = scalar_lea.hbm %s0, %s146
          %s148 = sshll.u32 %s139, 4
          %s149 = int_to_ptr.vmem [resolvable:$true] %s148
          %154 = dma.hbm_to_vmem [thread:$0]  %s147, 2048, %s149, %s136, 128, 128, 8
        $region20: #{tpu_custom_call.1} parent=15 // pred_fallthru
          _
        // Predicated region
        $region21: #{tpu_custom_call.1} parent=15 // pred_check
          %p155 = pneg %p79
        $region22: #{tpu_custom_call.1} parent=15 // pred_check_branch
          %157 = sbr.rel (%p155) target = $region24
        $region23: #{tpu_custom_call.1} parent=15 // pred_region
          %s158 = sand.u32 %s69, 1
          %s159 = scalar_lea.sflag [#allocation6], %s158
          %s160 = sand.u32 %s69, 1
          %s161 = smul.addr %s160, 8
          %s162 = scalar_lea.vmem [#allocation5], %s161
          %s164 = ssub.s32 128, 128
          %165 = vsyncadd %s159, %s164
          %s166 = sadd.s32 %s25, %s24
          %s167 = smul.addr %s166, 128
          %s168 = scalar_lea.hbm %s1, %s167
          %s170 = sshll.u32 %s162, 4
          %s171 = int_to_ptr.vmem [resolvable:$true] %s170
          %173 = dma.hbm_to_vmem [thread:$0]  %s168, 128, %s171, %s159
        $region24: #{tpu_custom_call.1} parent=15 // pred_fallthru
          _
      $region16: #{tpu_custom_call.1} parent=5 // pred_fallthru
        _
      %p174 = scmp.le.s32.totalorder 1, %s17
      %p175 = scmp.lt.s32.totalorder %s17, 3
      %p176 = pnand %p174, %p175
      %p177 = pneg %p176
      // Predicated region
      $region25: #{tpu_custom_call.1} parent=5 // pred_check
        _
      $region26: #{tpu_custom_call.1} parent=5 // pred_check_branch
        %179 = sbr.rel (%p176) target = $region28
      $region27: #{tpu_custom_call.1} parent=5 // pred_region
        %s180 = ssub.s32 %s17, 1
        %s181 = sand.u32 %s44, 1
        %s182 = scalar_lea.sflag [#allocation3], %s181
        %s183 = sand.u32 %s44, 1
        %s184 = smul.addr %s183, 128
        %s185 = scalar_lea.vmem [#allocation2], %s184
        // Predicated region
        $region29: #{tpu_custom_call.1} parent=27 // pred_check
          %p186 = pneg %p57
        $region30: #{tpu_custom_call.1} parent=27 // pred_check_branch
          %188 = sbr.rel (%p186) target = $region32
        $region31: #{tpu_custom_call.1} parent=27 // pred_region
          %189 = dma.done %s182, 2048
        $region32: #{tpu_custom_call.1} parent=27 // pred_fallthru
          _
        %s190 = sand.u32 %s72, 1
        %s191 = scalar_lea.sflag [#allocation6], %s190
        %s192 = sand.u32 %s72, 1
        %s193 = smul.addr %s192, 8
        %s194 = scalar_lea.vmem [#allocation5], %s193
        // Predicated region
        $region33: #{tpu_custom_call.1} parent=27 // pred_check
          %p195 = pneg %p85
        $region34: #{tpu_custom_call.1} parent=27 // pred_check_branch
          %197 = sbr.rel (%p195) target = $region36
        $region35: #{tpu_custom_call.1} parent=27 // pred_region
          %198 = dma.done %s191, 128
        $region36: #{tpu_custom_call.1} parent=27 // pred_fallthru
          _
        %s199 = sand.u32 %s44, 1
        %s200 = scalar_lea.sflag [#allocation3], %s199
        %s201 = sand.u32 %s44, 1
        %s202 = smul.addr %s201, 128
        %s203 = scalar_lea.vmem [#allocation2], %s202
        %p204 = pneg %p57
        %p205 = pneg %p54
        %s206 = sand.u32 %s72, 1
        %s207 = scalar_lea.sflag [#allocation6], %s206
        %s208 = sand.u32 %s72, 1
        %s209 = smul.addr %s208, 8
        %s210 = scalar_lea.vmem [#allocation5], %s209
        %p211 = pneg %p85
        %p212 = pneg %p82
        %p213 = pneg %p113
        %p214 = pneg %p110
        %s215 = sand.u32 %s100, 1
        %s216 = scalar_lea.sflag [#allocation4], %s215
        %s217 = sand.u32 %s100, 1
        %s218 = smul.addr %s217, 8
        %s219 = scalar_lea.vmem [#allocation7], %s218
        %s220 = smul.u32 4, %s27
        %v221 = vld [vmem:[%s194] sm:$0xff]
        %v222 = vunpack.c.0.s8 %v221
        %v223 = vunpack.c.1.s8 %v221
        %v224 = vunpack.c.2.s8 %v221
        %v225 = vunpack.c.3.s8 %v221
        %v226 = vld [vmem:[%s185] sm:$0xff]
        %v227 = vld [vmem:[%s185 + $0x8] sm:$0xff]
        %v228 = vld [vmem:[%s185 + $0x10] sm:$0xff]
        %v229 = vld [vmem:[%s185 + $0x18] sm:$0xff]
        %v230 = vmul.f32 %v226, 0.5
        %v231 = vmul.f32 %v227, 0.5
        %v232 = vmul.f32 %v228, 0.5
        %v233 = vmul.f32 %v229, 0.5
        %v234 = vtanh.pop %v230
        %v235 = vtanh.pop %v231
        %v236 = vtanh.pop %v232
        %v237 = vtanh.pop %v233
        %v238 = vmul.f32 %v234, 0.5
        %v239 = vmul.f32 %v235, 0.5
        %v240 = vmul.f32 %v236, 0.5
        %v241 = vmul.f32 %v237, 0.5
        %v242 = vadd.f32 %v238, 0.5
        %v243 = vadd.f32 %v239, 0.5
        %v244 = vadd.f32 %v240, 0.5
        %v245 = vadd.f32 %v241, 0.5
        %v246 = vmul.f32 %v242, 1.442695
        %v247 = vpow.pop %v246
        %v248 = vmul.f32 %v243, 1.442695
        %v249 = vpow.pop %v248
        %v250 = vmul.f32 %v244, 1.442695
        %v251 = vpow.pop %v250
        %v252 = vmul.f32 %v245, 1.442695
        %v253 = vpow.pop %v252
        %v254 = vadd.f32 %v247, 0.0
        %v255 = vadd.f32 %v249, 0.0
        %v256 = vadd.f32 %v251, 0.0
        %v257 = vadd.f32 %v253, 0.0
        %vm258 = vcmp.eq.s32.totalorder %v222, 0
        %vm259 = vcmp.eq.s32.totalorder %v223, 0
        %vm260 = vcmp.eq.s32.totalorder %v224, 0
        %vm261 = vcmp.eq.s32.totalorder %v225, 0
        %v262 = vsel %vm258, %v242, 0.0
        %v263 = vsel %vm259, %v243, 0.0
        %v264 = vsel %vm260, %v244, 0.0
        %v265 = vsel %vm261, %v245, 0.0
        %v266 = vadd.f32 %v262, 0.0
        %v267 = vadd.f32 %v263, 0.0
        %v268 = vadd.f32 %v264, 0.0
        %v269 = vadd.f32 %v265, 0.0
        %s270 = scalar_lea.vmem %s185, 32 [#allocation2]
        %v271 = vld [vmem:[%s270] sm:$0xff]
        %v272 = vld [vmem:[%s270 + $0x8] sm:$0xff]
        %v273 = vld [vmem:[%s270 + $0x10] sm:$0xff]
        %v274 = vld [vmem:[%s270 + $0x18] sm:$0xff]
        %v275 = vmul.f32 %v271, 0.5
        %v276 = vmul.f32 %v272, 0.5
        %v277 = vmul.f32 %v273, 0.5
        %v278 = vmul.f32 %v274, 0.5
        %v279 = vtanh.pop %v275
        %v280 = vtanh.pop %v276
        %v281 = vtanh.pop %v277
        %v282 = vtanh.pop %v278
        %v283 = vmul.f32 %v279, 0.5
        %v284 = vmul.f32 %v280, 0.5
        %v285 = vmul.f32 %v281, 0.5
        %v286 = vmul.f32 %v282, 0.5
        %v287 = vadd.f32 %v283, 0.5
        %v288 = vadd.f32 %v284, 0.5
        %v289 = vadd.f32 %v285, 0.5
        %v290 = vadd.f32 %v286, 0.5
        %v291 = vmul.f32 %v287, 1.442695
        %v292 = vpow.pop %v291
        %v293 = vmul.f32 %v288, 1.442695
        %v294 = vpow.pop %v293
        %v295 = vmul.f32 %v289, 1.442695
        %v296 = vpow.pop %v295
        %v297 = vmul.f32 %v290, 1.442695
        %v298 = vpow.pop %v297
        %v299 = vadd.f32 %v254, %v292
        %v300 = vadd.f32 %v255, %v294
        %v301 = vadd.f32 %v256, %v296
        %v302 = vadd.f32 %v257, %v298
        %vm303 = vcmp.eq.s32.totalorder %v222, 1
        %vm304 = vcmp.eq.s32.totalorder %v223, 1
        %vm305 = vcmp.eq.s32.totalorder %v224, 1
        %vm306 = vcmp.eq.s32.totalorder %v225, 1
        %v307 = vsel %vm303, %v287, 0.0
        %v308 = vsel %vm304, %v288, 0.0
        %v309 = vsel %vm305, %v289, 0.0
        %v310 = vsel %vm306, %v290, 0.0
        %v311 = vadd.f32 %v266, %v307
        %v312 = vadd.f32 %v267, %v308
        %v313 = vadd.f32 %v268, %v309
        %v314 = vadd.f32 %v269, %v310
        %s315 = scalar_lea.vmem %s185, 64 [#allocation2]
        %v316 = vld [vmem:[%s315] sm:$0xff]
        %v317 = vld [vmem:[%s315 + $0x8] sm:$0xff]
        %v318 = vld [vmem:[%s315 + $0x10] sm:$0xff]
        %v319 = vld [vmem:[%s315 + $0x18] sm:$0xff]
        %v320 = vmul.f32 %v316, 0.5
        %v321 = vmul.f32 %v317, 0.5
        %v322 = vmul.f32 %v318, 0.5
        %v323 = vmul.f32 %v319, 0.5
        %v324 = vtanh.pop %v320
        %v325 = vtanh.pop %v321
        %v326 = vtanh.pop %v322
        %v327 = vtanh.pop %v323
        %v328 = vmul.f32 %v324, 0.5
        %v329 = vmul.f32 %v325, 0.5
        %v330 = vmul.f32 %v326, 0.5
        %v331 = vmul.f32 %v327, 0.5
        %v332 = vadd.f32 %v328, 0.5
        %v333 = vadd.f32 %v329, 0.5
        %v334 = vadd.f32 %v330, 0.5
        %v335 = vadd.f32 %v331, 0.5
        %v336 = vmul.f32 %v332, 1.442695
        %v337 = vpow.pop %v336
        %v338 = vmul.f32 %v333, 1.442695
        %v339 = vpow.pop %v338
        %v340 = vmul.f32 %v334, 1.442695
        %v341 = vpow.pop %v340
        %v342 = vmul.f32 %v335, 1.442695
        %v343 = vpow.pop %v342
        %v344 = vadd.f32 %v299, %v337
        %v345 = vadd.f32 %v300, %v339
        %v346 = vadd.f32 %v301, %v341
        %v347 = vadd.f32 %v302, %v343
        %vm348 = vcmp.eq.s32.totalorder %v222, 2
        %vm349 = vcmp.eq.s32.totalorder %v223, 2
        %vm350 = vcmp.eq.s32.totalorder %v224, 2
        %vm351 = vcmp.eq.s32.totalorder %v225, 2
        %v352 = vsel %vm348, %v332, 0.0
        %v353 = vsel %vm349, %v333, 0.0
        %v354 = vsel %vm350, %v334, 0.0
        %v355 = vsel %vm351, %v335, 0.0
        %v356 = vadd.f32 %v311, %v352
        %v357 = vadd.f32 %v312, %v353
        %v358 = vadd.f32 %v313, %v354
        %v359 = vadd.f32 %v314, %v355
        %s360 = scalar_lea.vmem %s185, 96 [#allocation2]
        %v361 = vld [vmem:[%s360] sm:$0xff]
        %v362 = vld [vmem:[%s360 + $0x8] sm:$0xff]
        %v363 = vld [vmem:[%s360 + $0x10] sm:$0xff]
        %v364 = vld [vmem:[%s360 + $0x18] sm:$0xff]
        %v365 = vmul.f32 %v361, 0.5
        %v366 = vmul.f32 %v362, 0.5
        %v367 = vmul.f32 %v363, 0.5
        %v368 = vmul.f32 %v364, 0.5
        %v369 = vtanh.pop %v365
        %v370 = vtanh.pop %v366
        %v371 = vtanh.pop %v367
        %v372 = vtanh.pop %v368
        %v373 = vmul.f32 %v369, 0.5
        %v374 = vmul.f32 %v370, 0.5
        %v375 = vmul.f32 %v371, 0.5
        %v376 = vmul.f32 %v372, 0.5
        %v377 = vadd.f32 %v373, 0.5
        %v378 = vadd.f32 %v374, 0.5
        %v379 = vadd.f32 %v375, 0.5
        %v380 = vadd.f32 %v376, 0.5
        %v381 = vmul.f32 %v377, 1.442695
        %v382 = vpow.pop %v381
        %v383 = vmul.f32 %v378, 1.442695
        %v384 = vpow.pop %v383
        %v385 = vmul.f32 %v379, 1.442695
        %v386 = vpow.pop %v385
        %v387 = vmul.f32 %v380, 1.442695
        %v388 = vpow.pop %v387
        %v389 = vadd.f32 %v344, %v382
        %v390 = vadd.f32 %v345, %v384
        %v391 = vadd.f32 %v346, %v386
        %v392 = vadd.f32 %v347, %v388
        %vm393 = vcmp.eq.s32.totalorder %v222, 3
        %vm394 = vcmp.eq.s32.totalorder %v223, 3
        %vm395 = vcmp.eq.s32.totalorder %v224, 3
        %vm396 = vcmp.eq.s32.totalorder %v225, 3
        %v397 = vsel %vm393, %v377, 0.0
        %v398 = vsel %vm394, %v378, 0.0
        %v399 = vsel %vm395, %v379, 0.0
        %v400 = vsel %vm396, %v380, 0.0
        %v401 = vadd.f32 %v356, %v397
        %v402 = vadd.f32 %v357, %v398
        %v403 = vadd.f32 %v358, %v399
        %v404 = vadd.f32 %v359, %v400
        %vm405 = vcmp.ge.s32.totalorder %v222, 0
        %vm406 = vcmp.ge.s32.totalorder %v223, 0
        %vm407 = vcmp.ge.s32.totalorder %v224, 0
        %vm408 = vcmp.ge.s32.totalorder %v225, 0
        %v409 = vlog2.pop %v389
        %v410 = vmul.f32 %v409, 0.6931472
        %v411 = vlog2.pop %v390
        %v412 = vmul.f32 %v411, 0.6931472
        %v413 = vlog2.pop %v391
        %v414 = vmul.f32 %v413, 0.6931472
        %v415 = vlog2.pop %v392
        %v416 = vmul.f32 %v415, 0.6931472
        %v417 = vsub.f32 %v410, %v401
        %v418 = vsub.f32 %v412, %v402
        %v419 = vsub.f32 %v414, %v403
        %v420 = vsub.f32 %v416, %v404
        %v421 = vsel %vm405, %v417, 0.0
        %v422 = vsel %vm406, %v418, 0.0
        %v423 = vsel %vm407, %v419, 0.0
        %v424 = vsel %vm408, %v420, 0.0
        %v425 = vadd.f32 %v421, %v422
        %v426 = vadd.f32 %v425, %v423
        %v427 = vadd.f32 %v426, %v424
        %428 = vst [vmem:[%s219] sm:$0xff] %v427
        %s429 = sand.u32 %s100, 1
        %s430 = scalar_lea.sflag [#allocation4], %s429
        %s431 = sand.u32 %s100, 1
        %s432 = smul.addr %s431, 8
        %s433 = scalar_lea.vmem [#allocation7], %s432
        // Predicated region
        $region37: #{tpu_custom_call.1} parent=27 // pred_check
          %p434 = pneg %p110
        $region38: #{tpu_custom_call.1} parent=27 // pred_check_branch
          %436 = sbr.rel (%p434) target = $region40
        $region39: #{tpu_custom_call.1} parent=27 // pred_region
          %s438 = ssub.s32 128, 128
          %439 = vsyncadd %s430, %s438
          %s440 = sadd.s32 %s27, %s26
          %s441 = smul.addr %s440, 128
          %s442 = scalar_lea.hbm %s2, %s441
          %s444 = sshll.u32 %s433, 4
          %s445 = int_to_ptr.vmem [resolvable:$true] %s444
          %447 = dma.vmem_to_hbm [thread:$0]  %s445, 128, %s442, %s430
        $region40: #{tpu_custom_call.1} parent=27 // pred_fallthru
          _
      $region28: #{tpu_custom_call.1} parent=5 // pred_fallthru
        _
      %p448 = scmp.le.s32.totalorder 2, %s17
      // Predicated region
      $region41: #{tpu_custom_call.1} parent=5 // pred_check
        %p449 = pneg %p448
      $region42: #{tpu_custom_call.1} parent=5 // pred_check_branch
        %451 = sbr.rel (%p449) target = $region44
      $region43: #{tpu_custom_call.1} parent=5 // pred_region
        %s452 = ssub.s32 %s17, 2
        // Predicated region
        $region45: #{tpu_custom_call.1} parent=43 // pred_check
          %p453 = pneg %p116
        $region46: #{tpu_custom_call.1} parent=43 // pred_check_branch
          %455 = sbr.rel (%p453) target = $region48
        $region47: #{tpu_custom_call.1} parent=43 // pred_region
          %s456 = sand.u32 %s101, 1
          %s457 = scalar_lea.sflag [#allocation4], %s456
          %s458 = sand.u32 %s101, 1
          %s459 = smul.addr %s458, 8
          %s460 = scalar_lea.vmem [#allocation7], %s459
          %461 = dma.done %s457, 128
        $region48: #{tpu_custom_call.1} parent=43 // pred_fallthru
          _
      $region44: #{tpu_custom_call.1} parent=5 // pred_fallthru
        _
    $region6: #{tpu_custom_call.1} parent=1 // loop_footer
      %s21 = sadd.s32 1, %s17
    $region7: #{tpu_custom_call.1} parent=1 // loop_footer_branch
      %16 = sbr.rel target = $region3
    $region8: #{tpu_custom_call.1} parent=1 // loop_exit
      _
    %462 = vsyncpa [#allocation3], 1
    %s463 = scalar_lea.sflag [#allocation3], 1
    %464 = vsyncpa %s463, 1
    %465 = vsyncpa [#allocation6], 1
    %s466 = scalar_lea.sflag [#allocation6], 1
    %467 = vsyncpa %s466, 1
    %468 = vsyncpa [#allocation4], 1
    %s469 = scalar_lea.sflag [#allocation4], 1
    %470 = vsyncpa %s469, 1

</llo_original>
